<compile_context>
chip_gen: v7x
topology: tpu7x:2x2x1
jax: 0.10.0
libtpu: 0.0.40
codegen_flags: <defaults>
</compile_context>

<pallas_src>
import functools

import jax
import jax.numpy as jnp
from jax.experimental import pallas as pl
from jax.experimental.pallas import tpu as pltpu

KSIZE = 3                    # kernel size of both convs (padding=1, "same")
FUSED_K = 2 * KSIZE - 1      # 5-tap fused filter
HALO = FUSED_K // 2          # 2 zero columns on each side of the length axis


def _encoder_kernel(p_ref, x_ref, out_ref, xpad_ref, *, c_in):
    """One (block_N, L) batch slab per grid step.

    p_ref   : SMEM (7*c_in + 3,) f32 flat fused params:
              w_eff(c_in,5) | b_eff | a0(c_in) | c0 | aL(c_in) | cL
    x_ref   : VMEM (c_in, block_N, L)       input block (lane dim exactly L)
    out_ref : VMEM (block_N, L)
    xpad_ref: VMEM (c_in, block_N, L+4)     scratch: x with a 2-col zero halo
    """
    bn, L = out_ref.shape

    # ---- Stage the input into the zero-haloed scratch.  The halo writes are
    # tiny and the whole used region is rewritten every grid step, so the
    # "parallel" batch sharding stays safe (no cross-step carried state).
    zeros_h = jnp.zeros((c_in, bn, HALO), jnp.float32)
    xpad_ref[:, :, 0:HALO] = zeros_h
    xpad_ref[:, :, HALO + L:HALO + L + HALO] = zeros_h
    xpad_ref[:, :, HALO:HALO + L] = x_ref[...].astype(jnp.float32)

    # ---- Flat SMEM parameter accessors (all indices are static Python ints).
    def w_eff(c, j):
        return p_ref[c * FUSED_K + j]

    off = c_in * FUSED_K
    b_eff = p_ref[off]

    def a0(c):
        return p_ref[off + 1 + c]

    c0 = p_ref[off + 1 + c_in]

    def aL(c):
        return p_ref[off + 2 + c_in + c]

    cL = p_ref[off + 2 + 2 * c_in]

    # ---- Fused 5-tap Conv1d(c_in -> 1): pure VPU scalar-broadcast FMAs on
    # (bn, L) tiles.  Taps are shifted ref slices of the haloed scratch
    # (tap j at output t reads x[c, t + j - 2], zero outside [0, L-1]).
    acc = None
    for c in range(c_in):
        for j in range(FUSED_K):
            if j == HALO:
                tap = x_ref[c]                      # centre tap, lane-aligned
            else:
                tap = xpad_ref[c, :, j:j + L]       # shifted, zero-haloed
            term = w_eff(c, j) * tap
            acc = term if acc is None else acc + term
    y = acc + b_eff

    # ---- Boundary correction: PyTorch zero-pads the *biased* hidden
    # activations, so the pure composition is off only at columns 0 and L-1.
    corr0 = c0
    corrL = cL
    for c in range(c_in):
        corr0 = corr0 + a0(c) * x_ref[c, :, 0:1]          # uses x[c, :, 0]
        corrL = corrL + aL(c) * x_ref[c, :, L - 1:L]      # uses x[c, :, L-1]

    out_ref[...] = y
    out_ref[:, 0:1] = y[:, 0:1] - corr0
    out_ref[:, L - 1:L] = y[:, L - 1:L] - corrL


def _fuse_params(w1, b1, w2, b2):
    """Fold Conv1d(C->H,3,p=1) followed by Conv1d(H->1,3,p=1) into one 5-tap
    filter plus edge-correction coefficients.  Returns a flat f32 vector:
        w_eff (C,5) | b_eff | a0 (C) | c0 | aL (C) | cL
    """
    w1 = w1.astype(jnp.float32)        # (H, C, 3)
    b1 = b1.astype(jnp.float32)        # (H,)
    w2 = w2.astype(jnp.float32)[0]     # (H, 3)   single output channel
    b2 = b2.astype(jnp.float32)[0]     # scalar
    _, C, _ = w1.shape

    w_eff = jnp.zeros((C, FUSED_K), jnp.float32)
    for k1 in range(KSIZE):
        for k2 in range(KSIZE):
            w_eff = w_eff.at[:, k1 + k2].add(
                jnp.einsum("m,mc->c", w2[:, k2], w1[:, :, k1]))
    b_eff = b2 + jnp.sum(b1 * jnp.sum(w2, axis=-1))

    a0 = jnp.einsum("m,mc->c", w2[:, 0], w1[:, :, 2])   # column-0 correction
    c0 = jnp.sum(w2[:, 0] * b1)
    aL = jnp.einsum("m,mc->c", w2[:, 2], w1[:, :, 0])   # column-(L-1) corr.
    cL = jnp.sum(w2[:, 2] * b1)

    return jnp.concatenate([
        w_eff.reshape(-1), b_eff.reshape(1),
        a0, c0.reshape(1), aL, cL.reshape(1)])


def encoder_forward(x_lnc, w1, b1, w2, b2, *, block_n=None):
    """x_lnc: (L, N, C_in) float -> (N, 1, L) float32 (PyTorch Encoder.forward)."""
    L, N, C_in = x_lnc.shape
    c_hidden, c_in_w, k_w = w1.shape
    assert c_in_w == C_in and k_w == KSIZE
    assert w2.shape == (1, c_hidden, KSIZE) and b2.shape == (1,)
    assert L >= 2, "sequence length must be >= 2"

    # Single relayout pass (forced by the module's (L, N, C) interface):
    # batch on sublanes, length on lanes, no padding (the conv halo is built
    # in-kernel).  A producer that already emits (C, N, L) could skip this.
    # NOTE: storing x as bf16 in HBM would halve input traffic on the
    # HBM-bound chips (v5e); compute stays f32 in-kernel either way.
    x_cnl = jnp.transpose(x_lnc, (2, 1, 0)).astype(jnp.float32)

    params = _fuse_params(w1, b1, w2, b2)

    # ---- Batch block size: fit the per-step VMEM footprint (double-buffered
    # input/output blocks + haloed scratch + live temporaries) into a budget
    # derived from the chip's VMEM capacity; keep >= 2 grid steps when N is
    # large enough so the "parallel" axis can use both v7x TensorCores.
    try:
        vmem_cap = int(pltpu.get_tpu_info().vmem_capacity_bytes)
    except Exception:  # conservative fallback (v7x per-core VMEM)
        vmem_cap = 64 * 1024 * 1024
    budget = min(max(vmem_cap // 5, 8 << 20), 28 << 20)
    per_row = 4 * (2 * C_in * L             # input block, double-buffered
                   + C_in * (L + 2 * HALO)  # haloed scratch
                   + 2 * L                  # output block, double-buffered
                   + 4 * L)                 # live vreg temporaries
    if block_n is None:
        bn = max(8, budget // per_row)
        if N >= 16:
            half = -(-N // 2)               # ceil(N/2)
            bn = min(bn, -(-half // 8) * 8)  # >= 2 grid steps (v7x megacore)
    else:
        bn = max(1, min(block_n, N))
    if bn >= N:
        bn = N
    else:
        bn = max(8, (bn // 8) * 8)

    grid = (pl.cdiv(N, bn),)
    vmem_limit = int(min(vmem_cap, max(2 * per_row * bn + (2 << 20), 16 << 20)))
    kernel = functools.partial(_encoder_kernel, c_in=C_in)

    out_nl = pl.pallas_call(
        kernel,
        out_shape=jax.ShapeDtypeStruct((N, L), jnp.float32),
        grid=grid,
        in_specs=[
            pl.BlockSpec(memory_space=pltpu.MemorySpace.SMEM),        # params
            pl.BlockSpec((C_in, bn, L), lambda i: (0, i, 0)),          # input
        ],
        out_specs=pl.BlockSpec((bn, L), lambda i: (i, 0)),
        scratch_shapes=[pltpu.VMEM((C_in, bn, L + 2 * HALO), jnp.float32)],
        compiler_params=pltpu.CompilerParams(
            dimension_semantics=("parallel",),
            vmem_limit_bytes=vmem_limit,
        ),
    )(params, x_cnl)

    return out_nl.reshape(N, 1, L)


def _reference_forward(x_lnc, w1, b1, w2, b2):
    """Plain-JAX reference (same math as the PyTorch module, no Pallas)."""
    x = jnp.transpose(x_lnc, (1, 2, 0)).astype(jnp.float32)   # (N, C, L)

    def conv1d_same(x_ncl, w, b):
        xp = jnp.pad(x_ncl, ((0, 0), (0, 0), (1, 1)))
        L = x_ncl.shape[-1]
        out = jnp.zeros((x_ncl.shape[0], w.shape[0], L), jnp.float32)
        for k in range(KSIZE):
            out = out + jnp.einsum("oc,ncl->nol", w[:, :, k], xp[:, :, k:k + L])
        return out + b[None, :, None]

    h = conv1d_same(x, w1, b1)
    return conv1d_same(h, w2, b2)


if __name__ == "__main__":
    key = jax.random.PRNGKey(0)
    k_x, k_w1, k_b1, k_w2, k_b2, k_x2 = jax.random.split(key, 6)

    # Small shapes: seq L = 16, batch N = 2, state_size (OHLC) = 4.
    L, N, C_in = 16, 2, 4
    x = jax.random.normal(k_x, (L, N, C_in), dtype=jnp.float32)

    # Deterministic parameter init (PyTorch-default-style uniform bounds).
    bound1 = 1.0 / (C_in * KSIZE) ** 0.5
    w1 = jax.random.uniform(k_w1, (2, C_in, KSIZE), jnp.float32, -bound1, bound1)
    b1 = jax.random.uniform(k_b1, (2,), jnp.float32, -bound1, bound1)
    bound2 = 1.0 / (2 * KSIZE) ** 0.5
    w2 = jax.random.uniform(k_w2, (1, 2, KSIZE), jnp.float32, -bound2, bound2)
    b2 = jax.random.uniform(k_b2, (1,), jnp.float32, -bound2, bound2)

    out = jax.block_until_ready(encoder_forward(x, w1, b1, w2, b2))
    ref = _reference_forward(x, w1, b1, w2, b2)
    assert out.shape == (N, 1, L), out.shape
    assert jnp.allclose(out, ref, atol=5e-5, rtol=1e-4), "mismatch vs reference"

    # Second config: exercises batch blocking over N (grid > 1, partial block).
    L2, N2 = 16, 20
    x2 = jax.random.normal(k_x2, (L2, N2, C_in), dtype=jnp.float32)
    out2 = jax.block_until_ready(encoder_forward(x2, w1, b1, w2, b2, block_n=8))
    ref2 = _reference_forward(x2, w1, b1, w2, b2)
    assert out2.shape == (N2, 1, L2), out2.shape
    assert jnp.allclose(out2, ref2, atol=5e-5, rtol=1e-4), "mismatch (blocked)"

    print("KERNEL_OK")
</pallas_src>

<mosaic_0001>
module attributes {stable_mosaic.version = 11 : i64} {
  func.func @_encoder_kernel(%arg0: i32, %arg1: memref<31xf32, #tpu.memory_space<smem>>, %arg2: memref<4x2x16xf32, #tpu.memory_space<vmem>>, %arg3: memref<2x16xf32, #tpu.memory_space<vmem>>, %arg4: memref<4x2x20xf32, #tpu.memory_space<vmem>>) attributes {dimension_semantics = [#tpu.dimension_semantics<parallel>], iteration_bounds = array<i64: 1>, scalar_prefetch = 0 : i64, scratch_operands = 1 : i64, tpu.core_type = #tpu.core_type<tc>, window_params = [{transform_indices = @transform_0, window_bounds = array<i64: 31>}, {transform_indices = @transform_1, window_bounds = array<i64: 4, 2, 16>}, {transform_indices = @transform_2, window_bounds = array<i64: 2, 16>}]} {
    %cst = arith.constant 0.000000e+00 : f32
    %0 = vector.broadcast %cst : f32 to vector<4x2x2xf32>
    %c0 = arith.constant 0 : index
    %c0_0 = arith.constant 0 : index
    %c0_1 = arith.constant 0 : index
    %1 = vector.load %arg4[%c0, %c0_0, %c0_1] : memref<4x2x20xf32, #tpu.memory_space<vmem>>, vector<4x2x2xf32>
    tpu.vector_store %arg4[%c0, %c0_0, %c0_1], %0 {strides = array<i32>} : memref<4x2x20xf32, #tpu.memory_space<vmem>>, vector<4x2x2xf32>,
    %c0_2 = arith.constant 0 : index
    %c0_3 = arith.constant 0 : index
    %c18 = arith.constant 18 : index
    %2 = vector.load %arg4[%c0_2, %c0_3, %c18] : memref<4x2x20xf32, #tpu.memory_space<vmem>>, vector<4x2x2xf32>
    tpu.vector_store %arg4[%c0_2, %c0_3, %c18], %0 {strides = array<i32>} : memref<4x2x20xf32, #tpu.memory_space<vmem>>, vector<4x2x2xf32>,
    %c0_4 = arith.constant 0 : index
    %c0_5 = arith.constant 0 : index
    %c0_6 = arith.constant 0 : index
    %3 = vector.load %arg2[%c0_4, %c0_5, %c0_6] : memref<4x2x16xf32, #tpu.memory_space<vmem>>, vector<4x2x16xf32>
    %c0_7 = arith.constant 0 : index
    %c0_8 = arith.constant 0 : index
    %c2 = arith.constant 2 : index
    %4 = vector.load %arg4[%c0_7, %c0_8, %c2] : memref<4x2x20xf32, #tpu.memory_space<vmem>>, vector<4x2x16xf32>
    tpu.vector_store %arg4[%c0_7, %c0_8, %c2], %3 {strides = array<i32>} : memref<4x2x20xf32, #tpu.memory_space<vmem>>, vector<4x2x16xf32>,
    %c20 = arith.constant 20 : index
    %5 = memref.load %arg1[%c20] : memref<31xf32, #tpu.memory_space<smem>>
    %c25 = arith.constant 25 : index
    %6 = memref.load %arg1[%c25] : memref<31xf32, #tpu.memory_space<smem>>
    %c30 = arith.constant 30 : index
    %7 = memref.load %arg1[%c30] : memref<31xf32, #tpu.memory_space<smem>>
    %c0_9 = arith.constant 0 : index
    %c0_10 = arith.constant 0 : index
    %c0_11 = arith.constant 0 : index
    %8 = vector.load %arg4[%c0_9, %c0_10, %c0_11] : memref<4x2x20xf32, #tpu.memory_space<vmem>>, vector<1x2x16xf32>
    %9 = vector.shape_cast %8 : vector<1x2x16xf32> to vector<2x16xf32>
    %c0_12 = arith.constant 0 : index
    %10 = memref.load %arg1[%c0_12] : memref<31xf32, #tpu.memory_space<smem>>
    %11 = vector.broadcast %10 : f32 to vector<2x16xf32>
    %12 = arith.mulf %11, %9 : vector<2x16xf32>
    %c0_13 = arith.constant 0 : index
    %c0_14 = arith.constant 0 : index
    %c1 = arith.constant 1 : index
    %13 = vector.load %arg4[%c0_13, %c0_14, %c1] : memref<4x2x20xf32, #tpu.memory_space<vmem>>, vector<1x2x16xf32>
    %14 = vector.shape_cast %13 : vector<1x2x16xf32> to vector<2x16xf32>
    %c1_15 = arith.constant 1 : index
    %15 = memref.load %arg1[%c1_15] : memref<31xf32, #tpu.memory_space<smem>>
    %16 = vector.broadcast %15 : f32 to vector<2x16xf32>
    %17 = arith.mulf %16, %14 : vector<2x16xf32>
    %18 = arith.addf %12, %17 : vector<2x16xf32>
    %c0_16 = arith.constant 0 : index
    %c0_17 = arith.constant 0 : index
    %c0_18 = arith.constant 0 : index
    %19 = vector.load %arg2[%c0_16, %c0_17, %c0_18] : memref<4x2x16xf32, #tpu.memory_space<vmem>>, vector<1x2x16xf32>
    %20 = vector.shape_cast %19 : vector<1x2x16xf32> to vector<2x16xf32>
    %c2_19 = arith.constant 2 : index
    %21 = memref.load %arg1[%c2_19] : memref<31xf32, #tpu.memory_space<smem>>
    %22 = vector.broadcast %21 : f32 to vector<2x16xf32>
    %23 = arith.mulf %22, %20 : vector<2x16xf32>
    %24 = arith.addf %18, %23 : vector<2x16xf32>
    %c0_20 = arith.constant 0 : index
    %c0_21 = arith.constant 0 : index
    %c3 = arith.constant 3 : index
    %25 = vector.load %arg4[%c0_20, %c0_21, %c3] : memref<4x2x20xf32, #tpu.memory_space<vmem>>, vector<1x2x16xf32>
    %26 = vector.shape_cast %25 : vector<1x2x16xf32> to vector<2x16xf32>
    %c3_22 = arith.constant 3 : index
    %27 = memref.load %arg1[%c3_22] : memref<31xf32, #tpu.memory_space<smem>>
    %28 = vector.broadcast %27 : f32 to vector<2x16xf32>
    %29 = arith.mulf %28, %26 : vector<2x16xf32>
    %30 = arith.addf %24, %29 : vector<2x16xf32>
    %c0_23 = arith.constant 0 : index
    %c0_24 = arith.constant 0 : index
    %c4 = arith.constant 4 : index
    %31 = vector.load %arg4[%c0_23, %c0_24, %c4] : memref<4x2x20xf32, #tpu.memory_space<vmem>>, vector<1x2x16xf32>
    %32 = vector.shape_cast %31 : vector<1x2x16xf32> to vector<2x16xf32>
    %c4_25 = arith.constant 4 : index
    %33 = memref.load %arg1[%c4_25] : memref<31xf32, #tpu.memory_space<smem>>
    %34 = vector.broadcast %33 : f32 to vector<2x16xf32>
    %35 = arith.mulf %34, %32 : vector<2x16xf32>
    %36 = arith.addf %30, %35 : vector<2x16xf32>
    %c1_26 = arith.constant 1 : index
    %c0_27 = arith.constant 0 : index
    %c0_28 = arith.constant 0 : index
    %37 = vector.load %arg4[%c1_26, %c0_27, %c0_28] : memref<4x2x20xf32, #tpu.memory_space<vmem>>, vector<1x2x16xf32>
    %38 = vector.shape_cast %37 : vector<1x2x16xf32> to vector<2x16xf32>
    %c5 = arith.constant 5 : index
    %39 = memref.load %arg1[%c5] : memref<31xf32, #tpu.memory_space<smem>>
    %40 = vector.broadcast %39 : f32 to vector<2x16xf32>
    %41 = arith.mulf %40, %38 : vector<2x16xf32>
    %42 = arith.addf %36, %41 : vector<2x16xf32>
    %c1_29 = arith.constant 1 : index
    %c0_30 = arith.constant 0 : index
    %c1_31 = arith.constant 1 : index
    %43 = vector.load %arg4[%c1_29, %c0_30, %c1_31] : memref<4x2x20xf32, #tpu.memory_space<vmem>>, vector<1x2x16xf32>
    %44 = vector.shape_cast %43 : vector<1x2x16xf32> to vector<2x16xf32>
    %c6 = arith.constant 6 : index
    %45 = memref.load %arg1[%c6] : memref<31xf32, #tpu.memory_space<smem>>
    %46 = vector.broadcast %45 : f32 to vector<2x16xf32>
    %47 = arith.mulf %46, %44 : vector<2x16xf32>
    %48 = arith.addf %42, %47 : vector<2x16xf32>
    %c1_32 = arith.constant 1 : index
    %c0_33 = arith.constant 0 : index
    %c0_34 = arith.constant 0 : index
    %49 = vector.load %arg2[%c1_32, %c0_33, %c0_34] : memref<4x2x16xf32, #tpu.memory_space<vmem>>, vector<1x2x16xf32>
    %50 = vector.shape_cast %49 : vector<1x2x16xf32> to vector<2x16xf32>
    %c7 = arith.constant 7 : index
    %51 = memref.load %arg1[%c7] : memref<31xf32, #tpu.memory_space<smem>>
    %52 = vector.broadcast %51 : f32 to vector<2x16xf32>
    %53 = arith.mulf %52, %50 : vector<2x16xf32>
    %54 = arith.addf %48, %53 : vector<2x16xf32>
    %c1_35 = arith.constant 1 : index
    %c0_36 = arith.constant 0 : index
    %c3_37 = arith.constant 3 : index
    %55 = vector.load %arg4[%c1_35, %c0_36, %c3_37] : memref<4x2x20xf32, #tpu.memory_space<vmem>>, vector<1x2x16xf32>
    %56 = vector.shape_cast %55 : vector<1x2x16xf32> to vector<2x16xf32>
    %c8 = arith.constant 8 : index
    %57 = memref.load %arg1[%c8] : memref<31xf32, #tpu.memory_space<smem>>
    %58 = vector.broadcast %57 : f32 to vector<2x16xf32>
    %59 = arith.mulf %58, %56 : vector<2x16xf32>
    %60 = arith.addf %54, %59 : vector<2x16xf32>
    %c1_38 = arith.constant 1 : index
    %c0_39 = arith.constant 0 : index
    %c4_40 = arith.constant 4 : index
    %61 = vector.load %arg4[%c1_38, %c0_39, %c4_40] : memref<4x2x20xf32, #tpu.memory_space<vmem>>, vector<1x2x16xf32>
    %62 = vector.shape_cast %61 : vector<1x2x16xf32> to vector<2x16xf32>
    %c9 = arith.constant 9 : index
    %63 = memref.load %arg1[%c9] : memref<31xf32, #tpu.memory_space<smem>>
    %64 = vector.broadcast %63 : f32 to vector<2x16xf32>
    %65 = arith.mulf %64, %62 : vector<2x16xf32>
    %66 = arith.addf %60, %65 : vector<2x16xf32>
    %c2_41 = arith.constant 2 : index
    %c0_42 = arith.constant 0 : index
    %c0_43 = arith.constant 0 : index
    %67 = vector.load %arg4[%c2_41, %c0_42, %c0_43] : memref<4x2x20xf32, #tpu.memory_space<vmem>>, vector<1x2x16xf32>
    %68 = vector.shape_cast %67 : vector<1x2x16xf32> to vector<2x16xf32>
    %c10 = arith.constant 10 : index
    %69 = memref.load %arg1[%c10] : memref<31xf32, #tpu.memory_space<smem>>
    %70 = vector.broadcast %69 : f32 to vector<2x16xf32>
    %71 = arith.mulf %70, %68 : vector<2x16xf32>
    %72 = arith.addf %66, %71 : vector<2x16xf32>
    %c2_44 = arith.constant 2 : index
    %c0_45 = arith.constant 0 : index
    %c1_46 = arith.constant 1 : index
    %73 = vector.load %arg4[%c2_44, %c0_45, %c1_46] : memref<4x2x20xf32, #tpu.memory_space<vmem>>, vector<1x2x16xf32>
    %74 = vector.shape_cast %73 : vector<1x2x16xf32> to vector<2x16xf32>
    %c11 = arith.constant 11 : index
    %75 = memref.load %arg1[%c11] : memref<31xf32, #tpu.memory_space<smem>>
    %76 = vector.broadcast %75 : f32 to vector<2x16xf32>
    %77 = arith.mulf %76, %74 : vector<2x16xf32>
    %78 = arith.addf %72, %77 : vector<2x16xf32>
    %c2_47 = arith.constant 2 : index
    %c0_48 = arith.constant 0 : index
    %c0_49 = arith.constant 0 : index
    %79 = vector.load %arg2[%c2_47, %c0_48, %c0_49] : memref<4x2x16xf32, #tpu.memory_space<vmem>>, vector<1x2x16xf32>
    %80 = vector.shape_cast %79 : vector<1x2x16xf32> to vector<2x16xf32>
    %c12 = arith.constant 12 : index
    %81 = memref.load %arg1[%c12] : memref<31xf32, #tpu.memory_space<smem>>
    %82 = vector.broadcast %81 : f32 to vector<2x16xf32>
    %83 = arith.mulf %82, %80 : vector<2x16xf32>
    %84 = arith.addf %78, %83 : vector<2x16xf32>
    %c2_50 = arith.constant 2 : index
    %c0_51 = arith.constant 0 : index
    %c3_52 = arith.constant 3 : index
    %85 = vector.load %arg4[%c2_50, %c0_51, %c3_52] : memref<4x2x20xf32, #tpu.memory_space<vmem>>, vector<1x2x16xf32>
    %86 = vector.shape_cast %85 : vector<1x2x16xf32> to vector<2x16xf32>
    %c13 = arith.constant 13 : index
    %87 = memref.load %arg1[%c13] : memref<31xf32, #tpu.memory_space<smem>>
    %88 = vector.broadcast %87 : f32 to vector<2x16xf32>
    %89 = arith.mulf %88, %86 : vector<2x16xf32>
    %90 = arith.addf %84, %89 : vector<2x16xf32>
    %c2_53 = arith.constant 2 : index
    %c0_54 = arith.constant 0 : index
    %c4_55 = arith.constant 4 : index
    %91 = vector.load %arg4[%c2_53, %c0_54, %c4_55] : memref<4x2x20xf32, #tpu.memory_space<vmem>>, vector<1x2x16xf32>
    %92 = vector.shape_cast %91 : vector<1x2x16xf32> to vector<2x16xf32>
    %c14 = arith.constant 14 : index
    %93 = memref.load %arg1[%c14] : memref<31xf32, #tpu.memory_space<smem>>
    %94 = vector.broadcast %93 : f32 to vector<2x16xf32>
    %95 = arith.mulf %94, %92 : vector<2x16xf32>
    %96 = arith.addf %90, %95 : vector<2x16xf32>
    %c3_56 = arith.constant 3 : index
    %c0_57 = arith.constant 0 : index
    %c0_58 = arith.constant 0 : index
    %97 = vector.load %arg4[%c3_56, %c0_57, %c0_58] : memref<4x2x20xf32, #tpu.memory_space<vmem>>, vector<1x2x16xf32>
    %98 = vector.shape_cast %97 : vector<1x2x16xf32> to vector<2x16xf32>
    %c15 = arith.constant 15 : index
    %99 = memref.load %arg1[%c15] : memref<31xf32, #tpu.memory_space<smem>>
    %100 = vector.broadcast %99 : f32 to vector<2x16xf32>
    %101 = arith.mulf %100, %98 : vector<2x16xf32>
    %102 = arith.addf %96, %101 : vector<2x16xf32>
    %c3_59 = arith.constant 3 : index
    %c0_60 = arith.constant 0 : index
    %c1_61 = arith.constant 1 : index
    %103 = vector.load %arg4[%c3_59, %c0_60, %c1_61] : memref<4x2x20xf32, #tpu.memory_space<vmem>>, vector<1x2x16xf32>
    %104 = vector.shape_cast %103 : vector<1x2x16xf32> to vector<2x16xf32>
    %c16 = arith.constant 16 : index
    %105 = memref.load %arg1[%c16] : memref<31xf32, #tpu.memory_space<smem>>
    %106 = vector.broadcast %105 : f32 to vector<2x16xf32>
    %107 = arith.mulf %106, %104 : vector<2x16xf32>
    %108 = arith.addf %102, %107 : vector<2x16xf32>
    %c3_62 = arith.constant 3 : index
    %c0_63 = arith.constant 0 : index
    %c0_64 = arith.constant 0 : index
    %109 = vector.load %arg2[%c3_62, %c0_63, %c0_64] : memref<4x2x16xf32, #tpu.memory_space<vmem>>, vector<1x2x16xf32>
    %110 = vector.shape_cast %109 : vector<1x2x16xf32> to vector<2x16xf32>
    %c17 = arith.constant 17 : index
    %111 = memref.load %arg1[%c17] : memref<31xf32, #tpu.memory_space<smem>>
    %112 = vector.broadcast %111 : f32 to vector<2x16xf32>
    %113 = arith.mulf %112, %110 : vector<2x16xf32>
    %114 = arith.addf %108, %113 : vector<2x16xf32>
    %c3_65 = arith.constant 3 : index
    %c0_66 = arith.constant 0 : index
    %c3_67 = arith.constant 3 : index
    %115 = vector.load %arg4[%c3_65, %c0_66, %c3_67] : memref<4x2x20xf32, #tpu.memory_space<vmem>>, vector<1x2x16xf32>
    %116 = vector.shape_cast %115 : vector<1x2x16xf32> to vector<2x16xf32>
    %c18_68 = arith.constant 18 : index
    %117 = memref.load %arg1[%c18_68] : memref<31xf32, #tpu.memory_space<smem>>
    %118 = vector.broadcast %117 : f32 to vector<2x16xf32>
    %119 = arith.mulf %118, %116 : vector<2x16xf32>
    %120 = arith.addf %114, %119 : vector<2x16xf32>
    %c3_69 = arith.constant 3 : index
    %c0_70 = arith.constant 0 : index
    %c4_71 = arith.constant 4 : index
    %121 = vector.load %arg4[%c3_69, %c0_70, %c4_71] : memref<4x2x20xf32, #tpu.memory_space<vmem>>, vector<1x2x16xf32>
    %122 = vector.shape_cast %121 : vector<1x2x16xf32> to vector<2x16xf32>
    %c19 = arith.constant 19 : index
    %123 = memref.load %arg1[%c19] : memref<31xf32, #tpu.memory_space<smem>>
    %124 = vector.broadcast %123 : f32 to vector<2x16xf32>
    %125 = arith.mulf %124, %122 : vector<2x16xf32>
    %126 = arith.addf %120, %125 : vector<2x16xf32>
    %127 = vector.broadcast %5 : f32 to vector<2x16xf32>
    %128 = arith.addf %126, %127 : vector<2x16xf32>
    %c21 = arith.constant 21 : index
    %129 = memref.load %arg1[%c21] : memref<31xf32, #tpu.memory_space<smem>>
    %c0_72 = arith.constant 0 : index
    %c0_73 = arith.constant 0 : index
    %c0_74 = arith.constant 0 : index
    %130 = vector.load %arg2[%c0_72, %c0_73, %c0_74] : memref<4x2x16xf32, #tpu.memory_space<vmem>>, vector<1x2x1xf32>
    %131 = vector.shape_cast %130 : vector<1x2x1xf32> to vector<2x1xf32>
    %132 = vector.broadcast %129 : f32 to vector<2x1xf32>
    %133 = arith.mulf %132, %131 : vector<2x1xf32>
    %134 = vector.broadcast %6 : f32 to vector<2x1xf32>
    %135 = arith.addf %134, %133 : vector<2x1xf32>
    %c26 = arith.constant 26 : index
    %136 = memref.load %arg1[%c26] : memref<31xf32, #tpu.memory_space<smem>>
    %c0_75 = arith.constant 0 : index
    %c0_76 = arith.constant 0 : index
    %c15_77 = arith.constant 15 : index
    %137 = vector.load %arg2[%c0_75, %c0_76, %c15_77] : memref<4x2x16xf32, #tpu.memory_space<vmem>>, vector<1x2x1xf32>
    %138 = vector.shape_cast %137 : vector<1x2x1xf32> to vector<2x1xf32>
    %139 = vector.broadcast %136 : f32 to vector<2x1xf32>
    %140 = arith.mulf %139, %138 : vector<2x1xf32>
    %141 = vector.broadcast %7 : f32 to vector<2x1xf32>
    %142 = arith.addf %141, %140 : vector<2x1xf32>
    %c22 = arith.constant 22 : index
    %143 = memref.load %arg1[%c22] : memref<31xf32, #tpu.memory_space<smem>>
    %c1_78 = arith.constant 1 : index
    %c0_79 = arith.constant 0 : index
    %c0_80 = arith.constant 0 : index
    %144 = vector.load %arg2[%c1_78, %c0_79, %c0_80] : memref<4x2x16xf32, #tpu.memory_space<vmem>>, vector<1x2x1xf32>
    %145 = vector.shape_cast %144 : vector<1x2x1xf32> to vector<2x1xf32>
    %146 = vector.broadcast %143 : f32 to vector<2x1xf32>
    %147 = arith.mulf %146, %145 : vector<2x1xf32>
    %148 = arith.addf %135, %147 : vector<2x1xf32>
    %c27 = arith.constant 27 : index
    %149 = memref.load %arg1[%c27] : memref<31xf32, #tpu.memory_space<smem>>
    %c1_81 = arith.constant 1 : index
    %c0_82 = arith.constant 0 : index
    %c15_83 = arith.constant 15 : index
    %150 = vector.load %arg2[%c1_81, %c0_82, %c15_83] : memref<4x2x16xf32, #tpu.memory_space<vmem>>, vector<1x2x1xf32>
    %151 = vector.shape_cast %150 : vector<1x2x1xf32> to vector<2x1xf32>
    %152 = vector.broadcast %149 : f32 to vector<2x1xf32>
    %153 = arith.mulf %152, %151 : vector<2x1xf32>
    %154 = arith.addf %142, %153 : vector<2x1xf32>
    %c23 = arith.constant 23 : index
    %155 = memref.load %arg1[%c23] : memref<31xf32, #tpu.memory_space<smem>>
    %c2_84 = arith.constant 2 : index
    %c0_85 = arith.constant 0 : index
    %c0_86 = arith.constant 0 : index
    %156 = vector.load %arg2[%c2_84, %c0_85, %c0_86] : memref<4x2x16xf32, #tpu.memory_space<vmem>>, vector<1x2x1xf32>
    %157 = vector.shape_cast %156 : vector<1x2x1xf32> to vector<2x1xf32>
    %158 = vector.broadcast %155 : f32 to vector<2x1xf32>
    %159 = arith.mulf %158, %157 : vector<2x1xf32>
    %160 = arith.addf %148, %159 : vector<2x1xf32>
    %c28 = arith.constant 28 : index
    %161 = memref.load %arg1[%c28] : memref<31xf32, #tpu.memory_space<smem>>
    %c2_87 = arith.constant 2 : index
    %c0_88 = arith.constant 0 : index
    %c15_89 = arith.constant 15 : index
    %162 = vector.load %arg2[%c2_87, %c0_88, %c15_89] : memref<4x2x16xf32, #tpu.memory_space<vmem>>, vector<1x2x1xf32>
    %163 = vector.shape_cast %162 : vector<1x2x1xf32> to vector<2x1xf32>
    %164 = vector.broadcast %161 : f32 to vector<2x1xf32>
    %165 = arith.mulf %164, %163 : vector<2x1xf32>
    %166 = arith.addf %154, %165 : vector<2x1xf32>
    %c24 = arith.constant 24 : index
    %167 = memref.load %arg1[%c24] : memref<31xf32, #tpu.memory_space<smem>>
    %c3_90 = arith.constant 3 : index
    %c0_91 = arith.constant 0 : index
    %c0_92 = arith.constant 0 : index
    %168 = vector.load %arg2[%c3_90, %c0_91, %c0_92] : memref<4x2x16xf32, #tpu.memory_space<vmem>>, vector<1x2x1xf32>
    %169 = vector.shape_cast %168 : vector<1x2x1xf32> to vector<2x1xf32>
    %170 = vector.broadcast %167 : f32 to vector<2x1xf32>
    %171 = arith.mulf %170, %169 : vector<2x1xf32>
    %172 = arith.addf %160, %171 : vector<2x1xf32>
    %c29 = arith.constant 29 : index
    %173 = memref.load %arg1[%c29] : memref<31xf32, #tpu.memory_space<smem>>
    %c3_93 = arith.constant 3 : index
    %c0_94 = arith.constant 0 : index
    %c15_95 = arith.constant 15 : index
    %174 = vector.load %arg2[%c3_93, %c0_94, %c15_95] : memref<4x2x16xf32, #tpu.memory_space<vmem>>, vector<1x2x1xf32>
    %175 = vector.shape_cast %174 : vector<1x2x1xf32> to vector<2x1xf32>
    %176 = vector.broadcast %173 : f32 to vector<2x1xf32>
    %177 = arith.mulf %176, %175 : vector<2x1xf32>
    %178 = arith.addf %166, %177 : vector<2x1xf32>
    %c0_96 = arith.constant 0 : index
    %c0_97 = arith.constant 0 : index
    %179 = vector.load %arg3[%c0_96, %c0_97] : memref<2x16xf32, #tpu.memory_space<vmem>>, vector<2x16xf32>
    tpu.vector_store %arg3[%c0_96, %c0_97], %128 {strides = array<i32>} : memref<2x16xf32, #tpu.memory_space<vmem>>, vector<2x16xf32>,
    %180 = vector.extract_strided_slice %128 {offsets = [0, 0], sizes = [2, 1], strides = [1, 1]} : vector<2x16xf32> to vector<2x1xf32>
    %181 = arith.subf %180, %172 : vector<2x1xf32>
    %c0_98 = arith.constant 0 : index
    %c0_99 = arith.constant 0 : index
    %182 = vector.load %arg3[%c0_98, %c0_99] : memref<2x16xf32, #tpu.memory_space<vmem>>, vector<2x1xf32>
    tpu.vector_store %arg3[%c0_98, %c0_99], %181 {strides = array<i32>} : memref<2x16xf32, #tpu.memory_space<vmem>>, vector<2x1xf32>,
    %183 = vector.extract_strided_slice %128 {offsets = [0, 15], sizes = [2, 1], strides = [1, 1]} : vector<2x16xf32> to vector<2x1xf32>
    %184 = arith.subf %183, %178 : vector<2x1xf32>
    %c0_100 = arith.constant 0 : index
    %c15_101 = arith.constant 15 : index
    %185 = vector.load %arg3[%c0_100, %c15_101] : memref<2x16xf32, #tpu.memory_space<vmem>>, vector<2x1xf32>
    tpu.vector_store %arg3[%c0_100, %c15_101], %184 {strides = array<i32>} : memref<2x16xf32, #tpu.memory_space<vmem>>, vector<2x1xf32>,
    return
  }
  func.func @transform_0(%arg0: i32) -> i32 {
    %c0_i32 = arith.constant 0 : i32
    %c0_i32_0 = arith.constant 0 : i32
    return %c0_i32 : i32
  }
  func.func @transform_1(%arg0: i32) -> (i32, i32, i32) {
    %c0_i32 = arith.constant 0 : i32
    %c0_i32_0 = arith.constant 0 : i32
    %c0_i32_1 = arith.constant 0 : i32
    return %c0_i32, %arg0, %c0_i32_0 : i32, i32, i32
  }
  func.func @transform_2(%arg0: i32) -> (i32, i32) {
    %c0_i32 = arith.constant 0 : i32
    %c0_i32_0 = arith.constant 0 : i32
    return %arg0, %c0_i32 : i32, i32
  }
}

</mosaic_0001>

<llo_original>
// kernel: tpu_custom_call.1
$region0: #{tpu_custom_call.1}
  #allocation0 [shape = 'u32[]', space=smem, size = 0x4, offset = 0x4, fixed_abs, tag = 'smem constant byte address 0x4 - core index']
  #allocation1 [shape = 'u32[144,128]{1,0:T(1,128)}', space=vmem, size = 0x12000, scoped, tag = 'internal scratch']
  #allocation2 [shape = 'f32[4,2,20]{2,1,0:T(2,128)}', space=vmem, size = 0x1000, scoped, tag = 'scratch operand']
  %s0 = inlined_call_operand.hbm [shape: f32[31], index: 0, kind: input, shape index: {}]
  %s1 = inlined_call_operand.hbm [shape: f32[4,2,16], index: 1, kind: input, shape index: {}]
  %s2 = inlined_call_operand.hbm [shape: f32[2,16], index: 2, kind: output, shape index: {}]
  %s3 = sld [smem:[#allocation0]]
  $region26: #{tpu_custom_call.1} parent=0
    _
  %s5 = ssub.s32 1, %s3
  %s6 = scalar_select 0, %s5, %s3
  $region1: #{tpu_custom_call.1} parent=0
    #allocation3 [shape = 'u8[512]{0}', space=smem, size = 0x200, scoped, tag = 'input window, operand 0, single buffered']
    #allocation4 [shape = 's32[1]{0}', space=sflag, size = 0x4, scoped, tag = 'scoped memory for tpu_custom_call.1']
    #allocation5 [shape = 's32[1]{0}', space=sflag, size = 0x4, scoped, tag = 'scoped memory for tpu_custom_call.1']
    #allocation6 [shape = 's32[1]{0}', space=sflag, size = 0x4, scoped, tag = 'scoped memory for tpu_custom_call.1']
    #allocation7 [shape = 'u8[4096]{0}', space=vmem, size = 0x1000, scoped, tag = 'input window, operand 1, single buffered']
    #allocation8 [shape = 'u8[1024]{0}', space=vmem, size = 0x400, scoped, tag = 'output window, operand 0, single buffered']
    %7 = vsyncpa [#allocation6], 0
    %8 = vsyncpa [#allocation4], 0
    %9 = vsyncpa [#allocation5], 0
    // Predicated region
    $region2: #{tpu_custom_call.1} parent=1 // pred_check
      _
    $region3: #{tpu_custom_call.1} parent=1 // pred_check_branch
      %11 = sbr.rel (0) target = $region5
    $region4: #{tpu_custom_call.1} parent=1 // pred_region
      %s13 = ssub.s32 16, 16
      %14 = vsyncadd [#allocation6], %s13
      %17 = dma.hbm_to_smem %s0, 16, [#allocation3], [#allocation6]
    $region5: #{tpu_custom_call.1} parent=1 // pred_fallthru
      _
    // Predicated region
    $region6: #{tpu_custom_call.1} parent=1 // pred_check
      _
    $region7: #{tpu_custom_call.1} parent=1 // pred_check_branch
      %19 = sbr.rel (0) target = $region9
    $region8: #{tpu_custom_call.1} parent=1 // pred_region
      %s21 = ssub.s32 128, 128
      %22 = vsyncadd [#allocation4], %s21
      %s23 = sshll.u32 [#allocation7], 4
      %s24 = int_to_ptr.vmem [resolvable:$true] %s23
      %29 = dma.hbm_to_vmem [thread:$0]  %s1, 128, %s24, [#allocation4], 32, 32, 2
    $region9: #{tpu_custom_call.1} parent=1 // pred_fallthru
      _
    // Predicated region
    $region10: #{tpu_custom_call.1} parent=1 // pred_check
      _
    $region11: #{tpu_custom_call.1} parent=1 // pred_check_branch
      %31 = sbr.rel (0) target = $region13
    $region12: #{tpu_custom_call.1} parent=1 // pred_region
      %32 = dma.done [#allocation6], 16
    $region13: #{tpu_custom_call.1} parent=1 // pred_fallthru
      _
    // Predicated region
    $region14: #{tpu_custom_call.1} parent=1 // pred_check
      _
    $region15: #{tpu_custom_call.1} parent=1 // pred_check_branch
      %34 = sbr.rel (0) target = $region17
    $region16: #{tpu_custom_call.1} parent=1 // pred_region
      %35 = dma.done [#allocation4], 128
    $region17: #{tpu_custom_call.1} parent=1 // pred_fallthru
      _
    %36 = sfence
    %vm37 = vcmask 9216
    %38 = vst.msk [vmem:[#allocation2] sm:$0x3] %vm37, 0.0
    %39 = vst.msk [vmem:[#allocation2 + $0x2] sm:$0x3] %vm37, 0.0
    %40 = vst.msk [vmem:[#allocation2 + $0x4] sm:$0x3] %vm37, 0.0
    %41 = vst.msk [vmem:[#allocation2 + $0x6] sm:$0x3] %vm37, 0.0
    %vm42 = vcmask 156816
    %43 = vst.msk [vmem:[#allocation2] sm:$0x3] %vm42, 0.0
    %44 = vst.msk [vmem:[#allocation2 + $0x2] sm:$0x3] %vm42, 0.0
    %45 = vst.msk [vmem:[#allocation2 + $0x4] sm:$0x3] %vm42, 0.0
    %46 = vst.msk [vmem:[#allocation2 + $0x6] sm:$0x3] %vm42, 0.0
    %v47 = vld [vmem:[#allocation7] sm:$0x3]
    %v48 = vld [vmem:[#allocation7 + $0x2] sm:$0x3]
    %v49 = vld [vmem:[#allocation7 + $0x4] sm:$0x3]
    %v50 = vld [vmem:[#allocation7 + $0x6] sm:$0x3]
    %55 = vrot.lane.b32.xlu0 %v47, 2
    %v56 = vpop.permute.xlu0 %55
    %57 = vrot.lane.b32.xlu0 %v48, 2
    %v58 = vpop.permute.xlu0 %57
    %59 = vrot.lane.b32.xlu0 %v49, 2
    %v60 = vpop.permute.xlu0 %59
    %61 = vrot.lane.b32.xlu0 %v50, 2
    %v62 = vpop.permute.xlu0 %61
    %vm67 = vcmask 140304
    %68 = vst.msk [vmem:[#allocation2] sm:$0x3] %vm67, %v56
    %69 = vst.msk [vmem:[#allocation2 + $0x2] sm:$0x3] %vm67, %v58
    %70 = vst.msk [vmem:[#allocation2 + $0x4] sm:$0x3] %vm67, %v60
    %71 = vst.msk [vmem:[#allocation2 + $0x6] sm:$0x3] %vm67, %v62
    %s72 = sld [smem:[#allocation3 + $0x14]]
    %s73 = sld [smem:[#allocation3 + $0x19]]
    %s74 = sld [smem:[#allocation3 + $0x1e]]
    %v75 = vld [vmem:[#allocation2] sm:$0x3]
    %s76 = sld [smem:[#allocation3]]
    %v77 = vstv %s76
    %v78 = vmul.f32 %v77, %v75
    %s79 = sld [smem:[#allocation3 + $0x1]]
    %v80 = vstv %s79
    %v81 = vmul.f32 %v80, %v75
    %83 = vrot.lane.b32.xlu0 %v81, 127
    %v84 = vpop.permute.xlu0 %83
    %v86 = vadd.f32 %v78, %v84
    %v87 = vld [vmem:[#allocation7] sm:$0x3]
    %s88 = sld [smem:[#allocation3 + $0x2]]
    %v89 = vstv %s88
    %v90 = vmul.f32 %v89, %v87
    %v91 = vadd.f32 %v86, %v90
    %s92 = sld [smem:[#allocation3 + $0x3]]
    %v93 = vstv %s92
    %v94 = vmul.f32 %v93, %v75
    %96 = vrot.lane.b32.xlu0 %v94, 125
    %v97 = vpop.permute.xlu0 %96
    %v99 = vadd.f32 %v91, %v97
    %s100 = sld [smem:[#allocation3 + $0x4]]
    %v101 = vstv %s100
    %v102 = vmul.f32 %v101, %v75
    %104 = vrot.lane.b32.xlu0 %v102, 124
    %v105 = vpop.permute.xlu0 %104
    %v107 = vadd.f32 %v99, %v105
    %s108 = scalar_lea.vmem [#allocation2], 2
    %v109 = vld [vmem:[%s108] sm:$0x3]
    %s110 = sld [smem:[#allocation3 + $0x5]]
    %v111 = vstv %s110
    %v112 = vmul.f32 %v111, %v109
    %v113 = vadd.f32 %v107, %v112
    %s114 = sld [smem:[#allocation3 + $0x6]]
    %v115 = vstv %s114
    %v116 = vmul.f32 %v115, %v109
    %118 = vrot.lane.b32.xlu0 %v116, 127
    %v119 = vpop.permute.xlu0 %118
    %v121 = vadd.f32 %v113, %v119
    %s122 = scalar_lea.vmem [#allocation7], 2
    %v123 = vld [vmem:[%s122] sm:$0x3]
    %s124 = sld [smem:[#allocation3 + $0x7]]
    %v125 = vstv %s124
    %v126 = vmul.f32 %v125, %v123
    %v127 = vadd.f32 %v121, %v126
    %s128 = sld [smem:[#allocation3 + $0x8]]
    %v129 = vstv %s128
    %v130 = vmul.f32 %v129, %v109
    %132 = vrot.lane.b32.xlu0 %v130, 125
    %v133 = vpop.permute.xlu0 %132
    %v135 = vadd.f32 %v127, %v133
    %s136 = sld [smem:[#allocation3 + $0x9]]
    %v137 = vstv %s136
    %v138 = vmul.f32 %v137, %v109
    %140 = vrot.lane.b32.xlu0 %v138, 124
    %v141 = vpop.permute.xlu0 %140
    %v143 = vadd.f32 %v135, %v141
    %s144 = scalar_lea.vmem [#allocation2], 4
    %v145 = vld [vmem:[%s144] sm:$0x3]
    %s146 = sld [smem:[#allocation3 + $0xa]]
    %v147 = vstv %s146
    %v148 = vmul.f32 %v147, %v145
    %v149 = vadd.f32 %v143, %v148
    %s150 = sld [smem:[#allocation3 + $0xb]]
    %v151 = vstv %s150
    %v152 = vmul.f32 %v151, %v145
    %154 = vrot.lane.b32.xlu0 %v152, 127
    %v155 = vpop.permute.xlu0 %154
    %v157 = vadd.f32 %v149, %v155
    %s158 = scalar_lea.vmem [#allocation7], 4
    %v159 = vld [vmem:[%s158] sm:$0x3]
    %s160 = sld [smem:[#allocation3 + $0xc]]
    %v161 = vstv %s160
    %v162 = vmul.f32 %v161, %v159
    %v163 = vadd.f32 %v157, %v162
    %s164 = sld [smem:[#allocation3 + $0xd]]
    %v165 = vstv %s164
    %v166 = vmul.f32 %v165, %v145
    %168 = vrot.lane.b32.xlu0 %v166, 125
    %v169 = vpop.permute.xlu0 %168
    %v171 = vadd.f32 %v163, %v169
    %s172 = sld [smem:[#allocation3 + $0xe]]
    %v173 = vstv %s172
    %v174 = vmul.f32 %v173, %v145
    %176 = vrot.lane.b32.xlu0 %v174, 124
    %v177 = vpop.permute.xlu0 %176
    %v179 = vadd.f32 %v171, %v177
    %s180 = scalar_lea.vmem [#allocation2], 6
    %v181 = vld [vmem:[%s180] sm:$0x3]
    %s182 = sld [smem:[#allocation3 + $0xf]]
    %v183 = vstv %s182
    %v184 = vmul.f32 %v183, %v181
    %v185 = vadd.f32 %v179, %v184
    %s186 = sld [smem:[#allocation3 + $0x10]]
    %v187 = vstv %s186
    %v188 = vmul.f32 %v187, %v181
    %190 = vrot.lane.b32.xlu0 %v188, 127
    %v191 = vpop.permute.xlu0 %190
    %v193 = vadd.f32 %v185, %v191
    %s194 = scalar_lea.vmem [#allocation7], 6
    %v195 = vld [vmem:[%s194] sm:$0x3]
    %s196 = sld [smem:[#allocation3 + $0x11]]
    %v197 = vstv %s196
    %v198 = vmul.f32 %v197, %v195
    %v199 = vadd.f32 %v193, %v198
    %s200 = sld [smem:[#allocation3 + $0x12]]
    %v201 = vstv %s200
    %v202 = vmul.f32 %v201, %v181
    %204 = vrot.lane.b32.xlu0 %v202, 125
    %v205 = vpop.permute.xlu0 %204
    %v207 = vadd.f32 %v199, %v205
    %s208 = sld [smem:[#allocation3 + $0x13]]
    %v209 = vstv %s208
    %v210 = vmul.f32 %v209, %v181
    %212 = vrot.lane.b32.xlu0 %v210, 124
    %v213 = vpop.permute.xlu0 %212
    %v215 = vadd.f32 %v207, %v213
    %v216 = vstv %s72
    %v217 = vadd.f32 %v215, %v216
    %s218 = sld [smem:[#allocation3 + $0x15]]
    %v219 = vstv %s218
    %v220 = vmul.f32 %v219, %v87
    %v221 = vstv %s73
    %v222 = vadd.f32 %v221, %v220
    %s223 = sld [smem:[#allocation3 + $0x1a]]
    %v224 = vstv %s223
    %v225 = vmul.f32 %v224, %v87
    %v226 = vstv %s74
    %v227 = vadd.f32 %v226, %v225
    %s228 = sld [smem:[#allocation3 + $0x16]]
    %v229 = vstv %s228
    %v230 = vmul.f32 %v229, %v123
    %v231 = vadd.f32 %v222, %v230
    %s232 = sld [smem:[#allocation3 + $0x1b]]
    %v233 = vstv %s232
    %v234 = vmul.f32 %v233, %v123
    %v235 = vadd.f32 %v227, %v234
    %s236 = sld [smem:[#allocation3 + $0x17]]
    %v237 = vstv %s236
    %v238 = vmul.f32 %v237, %v159
    %v239 = vadd.f32 %v231, %v238
    %s240 = sld [smem:[#allocation3 + $0x1c]]
    %v241 = vstv %s240
    %v242 = vmul.f32 %v241, %v159
    %v243 = vadd.f32 %v235, %v242
    %s244 = sld [smem:[#allocation3 + $0x18]]
    %v245 = vstv %s244
    %v246 = vmul.f32 %v245, %v195
    %v247 = vadd.f32 %v239, %v246
    %s248 = sld [smem:[#allocation3 + $0x1d]]
    %v249 = vstv %s248
    %v250 = vmul.f32 %v249, %v195
    %v251 = vadd.f32 %v243, %v250
    %vm252 = vcmask 123904
    %253 = vst.msk [vmem:[#allocation8] sm:$0x3] %vm252, %v217
    %v254 = vsub.f32 %v217, %v247
    %vm255 = vcmask 1024
    %256 = vst.msk [vmem:[#allocation8] sm:$0x3] %vm255, %v254
    %v257 = vsub.f32 %v217, %v251
    %vm258 = vcmask 124024
    %259 = vst.msk [vmem:[#allocation8] sm:$0x3] %vm258, %v257
    // Predicated region
    $region18: #{tpu_custom_call.1} parent=1 // pred_check
      _
    $region19: #{tpu_custom_call.1} parent=1 // pred_check_branch
      %261 = sbr.rel (0) target = $region21
    $region20: #{tpu_custom_call.1} parent=1 // pred_region
      %s263 = ssub.s32 32, 32
      %264 = vsyncadd [#allocation5], %s263
      %s266 = sshll.u32 [#allocation8], 4
      %s267 = int_to_ptr.vmem [resolvable:$true] %s266
      %269 = dma.vmem_to_hbm [thread:$0]  %s267, 32, %s2, [#allocation5]
    $region21: #{tpu_custom_call.1} parent=1 // pred_fallthru
      _
    // Predicated region
    $region22: #{tpu_custom_call.1} parent=1 // pred_check
      _
    $region23: #{tpu_custom_call.1} parent=1 // pred_check_branch
      %271 = sbr.rel (0) target = $region25
    $region24: #{tpu_custom_call.1} parent=1 // pred_region
      %272 = dma.done [#allocation5], 32
    $region25: #{tpu_custom_call.1} parent=1 // pred_fallthru
      _
    %273 = vsyncpa [#allocation4], 1
    %274 = vsyncpa [#allocation5], 1
    %275 = vsyncpa [#allocation6], 1

</llo_original>
